<compile_context>
chip_gen: v7x
topology: tpu7x:2x2x1
jax: 0.10.0
libtpu: 0.0.40
codegen_flags: <defaults>
</compile_context>

<pallas_src>
import functools
import math

import jax
import jax.numpy as jnp
from jax.experimental import pallas as pl
from jax.experimental.pallas import tpu as pltpu

_LANES = 128
_VMEM_TILE_BUDGET = 32 * 1024 * 1024   # target footprint; fits all generations
_VMEM_LIMIT_BYTES = 48 * 1024 * 1024   # scoped limit (< v7x 64 MiB physical)


def _round_up(a, b):
    return (a + b - 1) // b * b


def _ln_segmented_kernel(x_ref, gamma_ref, beta_ref, bd_ref, o_ref, *, eps, inv_d):
    """LayerNorm on lane-packed rows (pack logical rows per 128-lane row).

    x_ref:     (TM, DP)  input tile, DP = pack * D (lane dense)
    gamma_ref: (1,  DP)  gamma tiled `pack` times (resident)
    beta_ref:  (1,  DP)  beta tiled `pack` times (resident)
    bd_ref:    (DP, DP)  bf16 block-diagonal ones matrix (resident)
    o_ref:     (TM, DP)  output tile
    """
    x = x_ref[...].astype(jnp.float32)
    bd = bd_ref[...]

    # Segmented lane reduction on the MXU: (v @ bd)[r, j] = sum of v[r, :]
    # over the D-lane segment containing lane j, i.e. the per-logical-row sum
    # broadcast back across that row's lanes.  Keeps everything lane-dense.
    seg_sum = jnp.dot(x.astype(jnp.bfloat16), bd,
                      preferred_element_type=jnp.float32)
    mean = seg_sum * inv_d
    xc = x - mean
    seg_sq = jnp.dot((xc * xc).astype(jnp.bfloat16), bd,
                     preferred_element_type=jnp.float32)
    inv_std = jax.lax.rsqrt(seg_sq * inv_d + eps)          # EUP

    y = xc * inv_std * gamma_ref[...] + beta_ref[...]
    o_ref[...] = y.astype(o_ref.dtype)


def _ln_rowwise_kernel(x_ref, gamma_ref, beta_ref, o_ref, *, eps, inv_d):
    """Fallback: full last-dim reduction per row (used when packing不 applies)."""
    x = x_ref[...].astype(jnp.float32)
    mean = jnp.sum(x, axis=-1, keepdims=True) * inv_d
    xc = x - mean
    var = jnp.sum(xc * xc, axis=-1, keepdims=True) * inv_d
    inv_std = jax.lax.rsqrt(var + eps)
    y = xc * inv_std * gamma_ref[...] + beta_ref[...]
    o_ref[...] = y.astype(o_ref.dtype)


@functools.partial(jax.jit, static_argnames=("eps",))
def layer_norm_forward(x, gamma, beta, *, eps=1e-5):
    """Forward of LayerNorm over the last dim; same shape/dtype as x."""
    orig_shape = x.shape
    out_dtype = x.dtype
    D = orig_shape[-1]
    M = math.prod(orig_shape[:-1]) if len(orig_shape) > 1 else 1

    # ---- Lane-dense packing: `pack` consecutive logical rows per 128-lane row.
    if D < _LANES and _LANES % D == 0 and M % (_LANES // D) == 0:
        pack = _LANES // D
    else:
        pack = 1
    Dp = D * pack
    Mp = M // pack

    flat = x.reshape(Mp, Dp)

    # ---- Dtype-aware sublane multiple for the row tile (8/16/32).
    in_bytes = jnp.dtype(x.dtype).itemsize
    out_bytes = jnp.dtype(out_dtype).itemsize
    sub = {4: 8, 2: 16, 1: 32}.get(in_bytes, 8)

    # ---- Budget-derived row tile: 2x double-buffered input + 2x output blocks
    # plus ~5 f32-equivalent in-kernel temporaries (x, xc, y, bf16 casts, ...).
    bytes_per_row = Dp * (2 * in_bytes + 2 * out_bytes + 5 * 4)
    tm = max(sub, (_VMEM_TILE_BUDGET // bytes_per_row) // sub * sub)
    tm = min(tm, _round_up(Mp, sub))
    # Guarantee >=2 grid steps when possible so v7x's two TensorCores both get
    # work (no-op on single-TC v5e/v6e; tiles stay well above overhead floor).
    if tm >= Mp and Mp >= 2 * sub:
        tm = _round_up(-(-Mp // 2), sub)

    grid = (pl.cdiv(Mp, tm),)   # ragged tail handled by Pallas; no pad/slice copies

    gamma_p = jnp.tile(gamma.astype(jnp.float32).reshape(D), pack).reshape(1, Dp)
    beta_p = jnp.tile(beta.astype(jnp.float32).reshape(D), pack).reshape(1, Dp)

    if pack > 1:
        # Block-diagonal ones: bd[i, j] = 1 iff lanes i, j are in the same
        # D-wide segment.  Exactly representable in bf16; resident in VMEM.
        seg_id = jnp.arange(Dp, dtype=jnp.int32) // D
        bd = (seg_id[:, None] == seg_id[None, :]).astype(jnp.bfloat16)
        kernel = functools.partial(_ln_segmented_kernel, eps=float(eps), inv_d=1.0 / D)
        in_specs = [
            pl.BlockSpec((tm, Dp), lambda i: (i, 0)),    # x row-tile
            pl.BlockSpec((1, Dp), lambda i: (0, 0)),     # gamma (resident)
            pl.BlockSpec((1, Dp), lambda i: (0, 0)),     # beta  (resident)
            pl.BlockSpec((Dp, Dp), lambda i: (0, 0)),    # block-diag (resident)
        ]
        args = (flat, gamma_p, beta_p, bd)
    else:
        kernel = functools.partial(_ln_rowwise_kernel, eps=float(eps), inv_d=1.0 / D)
        in_specs = [
            pl.BlockSpec((tm, Dp), lambda i: (i, 0)),
            pl.BlockSpec((1, Dp), lambda i: (0, 0)),
            pl.BlockSpec((1, Dp), lambda i: (0, 0)),
        ]
        args = (flat, gamma_p, beta_p)

    out = pl.pallas_call(
        kernel,
        out_shape=jax.ShapeDtypeStruct((Mp, Dp), out_dtype),
        grid_spec=pltpu.PrefetchScalarGridSpec(
            num_scalar_prefetch=0,
            grid=grid,
            in_specs=in_specs,
            out_specs=pl.BlockSpec((tm, Dp), lambda i: (i, 0)),
        ),
        compiler_params=pltpu.CompilerParams(
            dimension_semantics=("parallel",),
            vmem_limit_bytes=_VMEM_LIMIT_BYTES,
        ),
    )(*args)

    return out.reshape(orig_shape)


def _reference(x, gamma, beta, eps=1e-5):
    """Plain-JAX reference of F.layer_norm over the last dim (f32 compute)."""
    xf = x.astype(jnp.float32)
    mean = jnp.mean(xf, axis=-1, keepdims=True)
    var = jnp.mean((xf - mean) ** 2, axis=-1, keepdims=True)
    y = (xf - mean) * jax.lax.rsqrt(var + eps) * gamma.astype(jnp.float32) \
        + beta.astype(jnp.float32)
    return y.astype(x.dtype)


if __name__ == "__main__":
    key = jax.random.PRNGKey(0)
    k_x, k_g, k_b, k_x2 = jax.random.split(key, 4)

    # --- Main config consistent with the module: hidden dim 32, (B, N) tokens.
    dim = 32
    B, N = 2, 64
    x = jax.random.normal(k_x, (B, N, dim), dtype=jnp.float32)
    gamma = jnp.ones((dim,), jnp.float32)      # nn.Parameter init
    beta = jnp.zeros((dim,), jnp.float32)      # registered buffer init

    y = layer_norm_forward(x, gamma, beta)
    jax.block_until_ready(y)
    assert y.shape == x.shape and y.dtype == x.dtype
    # Lane-packed path sums segments on the MXU (bf16 multiplicands, f32 acc),
    # so allow ~1e-3-level tolerance vs. the pure-f32 reference.
    assert jnp.allclose(y, _reference(x, gamma, beta), atol=5e-3, rtol=5e-3), \
        "layernorm mismatch (default affine)"

    # --- Non-trivial gamma/beta.
    gamma2 = jax.random.normal(k_g, (dim,), dtype=jnp.float32)
    beta2 = 0.1 * jax.random.normal(k_b, (dim,), dtype=jnp.float32)
    y2 = layer_norm_forward(x, gamma2, beta2)
    jax.block_until_ready(y2)
    assert jnp.allclose(y2, _reference(x, gamma2, beta2), atol=5e-3, rtol=5e-3), \
        "layernorm mismatch (random affine)"

    # --- Packed path with a ragged last tile (no host-side padding needed).
    x3 = jax.random.normal(k_x2, (2, 68, dim), dtype=jnp.float32)
    y3 = layer_norm_forward(x3, gamma2, beta2)
    jax.block_until_ready(y3)
    assert jnp.allclose(y3, _reference(x3, gamma2, beta2), atol=5e-3, rtol=5e-3), \
        "layernorm mismatch (ragged packed)"

    # --- Row-wise fallback path (D does not divide 128) with a ragged block.
    dim4 = 96
    x4 = jax.random.normal(k_x2, (7, 2, dim4), dtype=jnp.float32)
    g4 = jax.random.normal(k_g, (dim4,), dtype=jnp.float32)
    b4 = jnp.zeros((dim4,), jnp.float32)
    y4 = layer_norm_forward(x4, g4, b4)
    jax.block_until_ready(y4)
    assert jnp.allclose(y4, _reference(x4, g4, b4), atol=1e-5, rtol=1e-5), \
        "layernorm mismatch (row-wise fallback)"

    # --- bf16 input exercises the dtype-aware sublane clamp (16-row multiple).
    x5 = x.astype(jnp.bfloat16)
    y5 = layer_norm_forward(x5, gamma, beta)
    jax.block_until_ready(y5)
    assert y5.dtype == jnp.bfloat16
    assert jnp.allclose(y5.astype(jnp.float32),
                        _reference(x5, gamma, beta).astype(jnp.float32),
                        atol=5e-2, rtol=5e-2), "layernorm mismatch (bf16)"

    print("KERNEL_OK")
</pallas_src>

<mosaic_0001>
module attributes {stable_mosaic.version = 11 : i64} {
  func.func @_ln_segmented_kernel(%arg0: i32, %arg1: memref<16x128xf32, #tpu.memory_space<vmem>>, %arg2: memref<1x128xf32, #tpu.memory_space<vmem>>, %arg3: memref<1x128xf32, #tpu.memory_space<vmem>>, %arg4: memref<128x128xbf16, #tpu.memory_space<vmem>>, %arg5: memref<16x128xf32, #tpu.memory_space<vmem>>) attributes {dimension_semantics = [#tpu.dimension_semantics<parallel>], iteration_bounds = array<i64: 2>, scalar_prefetch = 0 : i64, scratch_operands = 0 : i64, tpu.core_type = #tpu.core_type<tc>, window_params = [{transform_indices = @transform_0, window_bounds = array<i64: 16, 128>}, {pipeline_mode = #tpu.pipeline_mode<synchronous>, transform_indices = @transform_1, window_bounds = array<i64: 1, 128>}, {pipeline_mode = #tpu.pipeline_mode<synchronous>, transform_indices = @transform_2, window_bounds = array<i64: 1, 128>}, {pipeline_mode = #tpu.pipeline_mode<synchronous>, transform_indices = @transform_3, window_bounds = array<i64: 128, 128>}, {transform_indices = @transform_4, window_bounds = array<i64: 16, 128>}]} {
    %c0 = arith.constant 0 : index
    %c0_0 = arith.constant 0 : index
    %0 = vector.load %arg1[%c0, %c0_0] : memref<16x128xf32, #tpu.memory_space<vmem>>, vector<16x128xf32>
    %c0_1 = arith.constant 0 : index
    %c0_2 = arith.constant 0 : index
    %1 = vector.load %arg4[%c0_1, %c0_2] : memref<128x128xbf16, #tpu.memory_space<vmem>>, vector<128x128xbf16>
    %2 = arith.truncf %0 : vector<16x128xf32> to vector<16x128xbf16>
    %cst = arith.constant dense<0.000000e+00> : vector<16x128xf32>
    %3 = tpu.matmul %2, %1, %cst {dimension_numbers = #tpu.dot_dimension_numbers<[1], [0], [0], [1], [0, 0, 1, 1], [], []>} : vector<16x128xbf16>, vector<128x128xbf16>, vector<16x128xf32> -> vector<16x128xf32>
    %cst_3 = arith.constant 3.125000e-02 : f32
    %4 = vector.broadcast %cst_3 : f32 to vector<16x128xf32>
    %5 = arith.mulf %3, %4 : vector<16x128xf32>
    %6 = arith.subf %0, %5 : vector<16x128xf32>
    %7 = arith.mulf %6, %6 : vector<16x128xf32>
    %8 = arith.truncf %7 : vector<16x128xf32> to vector<16x128xbf16>
    %cst_4 = arith.constant dense<0.000000e+00> : vector<16x128xf32>
    %9 = tpu.matmul %8, %1, %cst_4 {dimension_numbers = #tpu.dot_dimension_numbers<[1], [0], [0], [1], [0, 0, 1, 1], [], []>} : vector<16x128xbf16>, vector<128x128xbf16>, vector<16x128xf32> -> vector<16x128xf32>
    %cst_5 = arith.constant 3.125000e-02 : f32
    %10 = vector.broadcast %cst_5 : f32 to vector<16x128xf32>
    %11 = arith.mulf %9, %10 : vector<16x128xf32>
    %cst_6 = arith.constant 9.99999974E-6 : f32
    %12 = vector.broadcast %cst_6 : f32 to vector<16x128xf32>
    %13 = arith.addf %11, %12 : vector<16x128xf32>
    %14 = math.rsqrt %13 : vector<16x128xf32>
    %15 = arith.mulf %6, %14 : vector<16x128xf32>
    %c0_7 = arith.constant 0 : index
    %c0_8 = arith.constant 0 : index
    %16 = vector.load %arg2[%c0_7, %c0_8] : memref<1x128xf32, #tpu.memory_space<vmem>>, vector<1x128xf32>
    %17 = vector.broadcast %16 : vector<1x128xf32> to vector<16x128xf32>
    %18 = arith.mulf %15, %17 : vector<16x128xf32>
    %c0_9 = arith.constant 0 : index
    %c0_10 = arith.constant 0 : index
    %19 = vector.load %arg3[%c0_9, %c0_10] : memref<1x128xf32, #tpu.memory_space<vmem>>, vector<1x128xf32>
    %20 = vector.broadcast %19 : vector<1x128xf32> to vector<16x128xf32>
    %21 = arith.addf %18, %20 : vector<16x128xf32>
    %c0_11 = arith.constant 0 : index
    %c0_12 = arith.constant 0 : index
    %22 = vector.load %arg5[%c0_11, %c0_12] : memref<16x128xf32, #tpu.memory_space<vmem>>, vector<16x128xf32>
    tpu.vector_store %arg5[%c0_11, %c0_12], %21 {strides = array<i32>} : memref<16x128xf32, #tpu.memory_space<vmem>>, vector<16x128xf32>,
    return
  }
  func.func @transform_0(%arg0: i32) -> (i32, i32) {
    %c0_i32 = arith.constant 0 : i32
    %c0_i32_0 = arith.constant 0 : i32
    return %arg0, %c0_i32 : i32, i32
  }
  func.func @transform_1(%arg0: i32) -> (i32, i32) {
    %c0_i32 = arith.constant 0 : i32
    %c0_i32_0 = arith.constant 0 : i32
    %c0_i32_1 = arith.constant 0 : i32
    return %c0_i32, %c0_i32_0 : i32, i32
  }
  func.func @transform_2(%arg0: i32) -> (i32, i32) {
    %c0_i32 = arith.constant 0 : i32
    %c0_i32_0 = arith.constant 0 : i32
    %c0_i32_1 = arith.constant 0 : i32
    return %c0_i32, %c0_i32_0 : i32, i32
  }
  func.func @transform_3(%arg0: i32) -> (i32, i32) {
    %c0_i32 = arith.constant 0 : i32
    %c0_i32_0 = arith.constant 0 : i32
    %c0_i32_1 = arith.constant 0 : i32
    return %c0_i32, %c0_i32_0 : i32, i32
  }
  func.func @transform_4(%arg0: i32) -> (i32, i32) {
    %c0_i32 = arith.constant 0 : i32
    %c0_i32_0 = arith.constant 0 : i32
    return %arg0, %c0_i32 : i32, i32
  }
}

</mosaic_0001>

<llo_original>
// kernel: tile.14
$region0: #{tile.14}
  %s0 = inlined_call_operand.vmem [shape: f32[4,32], index: 0, kind: input, shape index: {}]
  %s1 = inlined_call_operand.vmem [shape: f32[1,128], index: 1, kind: output, shape index: {}]
  $region1: #{tile.14} parent=0
    #allocation0 [shape = 'u8[4096]{0}', space=vmem, size = 0x1000, scoped, tag = 'scoped mem for output reshape']
    #allocation1 [shape = 'u8[4096]{0}', space=vmem, size = 0x1000, scoped, tag = 'scoped mem for input reshape']
    %s3 = sshllo.u32 0, 4
    %v4 = vld [vmem:[%s0] sm:%s3]
    %5 = vst [vmem:[#allocation1] sm:%s3] %v4
    %v6 = vld [vmem:[#allocation1] sm:$0x1]
    %vm7 = vcmask 261120
    %8 = vst.msk [vmem:[#allocation0] sm:$0x1] %vm7, %v6
    %s9 = scalar_lea.vmem [#allocation1], 3
    %v10 = vld [vmem:[%s9] sm:$0x1]
    %11 = vrot.lane.b32.xlu0 %v10, 96
    %v12 = vpop.permute.xlu0 %11
    %vm13 = vcmask 1048320
    %14 = vst.msk [vmem:[#allocation0] sm:$0x1] %vm13, %v12
    %s15 = scalar_lea.vmem [#allocation1], 2
    %v16 = vld [vmem:[%s15] sm:$0x1]
    %17 = vrot.lane.b32.xlu0 %v16, 64
    %v18 = vpop.permute.xlu0 %17
    %vm19 = vcmask 785920
    %20 = vst.msk [vmem:[#allocation0] sm:$0x1] %vm19, %v18
    %s21 = scalar_lea.vmem [#allocation1], 1
    %v22 = vld [vmem:[%s21] sm:$0x1]
    %23 = vrot.lane.b32.xlu0 %v22, 32
    %v24 = vpop.permute.xlu0 %23
    %vm25 = vcmask 523520
    %26 = vst.msk [vmem:[#allocation0] sm:$0x1] %vm25, %v24
    %s28 = sshllo.u32 0, 1
    %v30 = vld [vmem:[#allocation0] sm:%s28]
    %s31 = sshllo.u32 0, 1
    %32 = vst [vmem:[%s1] sm:%s31] %v30

// kernel: tile.13
$region0: #{tile.13}
  #allocation0 [shape = 's32[1]{0}', space=sflag, size = 0x4, scoped, tag = 'scoped memory for tile.13']
  %s0 = inlined_call_operand.vmem [shape: f32[32], index: 0, kind: input, shape index: {}]
  %s1 = inlined_call_operand.vmem [shape: f32[4,32], index: 1, kind: output, shape index: {}]
  // Predicated region
  $region2: #{tile.13} parent=0 // pred_check
    _
  $region3: #{tile.13} parent=0 // pred_check_branch
    %3 = sbr.rel (0) target = $region5
  $region4: #{tile.13} parent=0 // pred_region
    _
  $region5: #{tile.13} parent=0 // pred_fallthru
    _
  %v4 = vld [vmem:[%s0] ss:$0 sm:$0xff]
  %5 = vst [vmem:[%s1] sm:$0xf] %v4

// kernel: layer_norm_forward.1
$region0: #{layer_norm_forward.1}
  #allocation0 [shape = 'u32[]', space=smem, size = 0x4, offset = 0x4, fixed_abs, tag = 'smem constant byte address 0x4 - core index']
  #allocation1 [shape = 'u32[144,128]{1,0:T(1,128)}', space=vmem, size = 0x12000, scoped, tag = 'internal scratch']
  %s0 = inlined_call_operand.vmem [shape: f32[32,128], index: 0, kind: input, shape index: {}]
  %s1 = inlined_call_operand.vmem [shape: f32[1,128], index: 1, kind: input, shape index: {}]
  %s2 = inlined_call_operand.vmem [shape: f32[1,128], index: 2, kind: input, shape index: {}]
  %s3 = inlined_call_operand.vmem [shape: bf16[128,128], index: 3, kind: input, shape index: {}]
  %s4 = inlined_call_operand.vmem [shape: f32[32,128], index: 4, kind: output, shape index: {}]
  %s5 = sld [smem:[#allocation0]]
  $region49: #{layer_norm_forward.1} parent=0
    _
  %s7 = ssub.s32 1, %s5
  %s8 = scalar_select 0, %s7, %s5
  loop: start=0, step=1, limit=4
  $region2: #{layer_norm_forward.1} parent=0 // loop_pre_header
    _
  $region3: #{layer_norm_forward.1} parent=0 // loop_header
    %s10 = sphi 0, %s14
    %p11 = scmp.ge.s32.totalorder %s10, 4
    %s20 = sphi 0, %s22
    %s23 = sphi 0, %s20
    %s24 = sphi 0, %s23
    %s40 = sphi 0, %s24
    %s44 = sphi 0, %s44
    %s46 = sphi 0, %s44
    %s47 = sphi 0, %s46
    %s61 = sphi 0, %s47
    %s65 = sphi 0, %s65
    %s67 = sphi 0, %s65
    %s68 = sphi 0, %s67
    %s82 = sphi 0, %s68
    %s86 = sphi 0, %s86
    %s88 = sphi 0, %s86
    %s89 = sphi 0, %s88
    %s103 = sphi 0, %s89
    %s109 = sphi 0, %s111
    %s112 = sphi 0, %s109
    %s113 = sphi 0, %s112
    %s129 = sphi 0, %s113
  $region4: #{layer_norm_forward.1} parent=0 // loop_header_branch
    %13 = sbr.rel (%p11) target = $region8
  $region5: #{layer_norm_forward.1} parent=0 // loop_body
    %s15 = ssub.s32 %s10, 1
    %s16 = ssub.s32 %s10, 2
    %s17 = sadd.s32 %s10, 1
    %s18 = ssub.s32 %s10, %s17
    %p19 = scmp.eq.s32.totalorder %s18, 0
    %s21 = sadd.s32 %s20, 1
    %s22 = scalar_select %p19, %s20, %s21
    %p25 = pneg %p19
    %p26 = scmp.eq.s32.totalorder %s10, 1
    %p27 = por %p25, %p26
    %p28 = scmp.ne.s32.totalorder %s20, %s23
    %p29 = scmp.eq.s32.totalorder %s10, 0
    %p30 = por %p28, %p29
    %p31 = scmp.ne.s32.totalorder %s20, %s23
    %p32 = scmp.eq.s32.totalorder %s15, 1
    %p33 = por %p31, %p32
    %p34 = scmp.ne.s32.totalorder %s23, %s24
    %p35 = scmp.eq.s32.totalorder %s15, 0
    %p36 = por %p34, %p35
    %p37 = scmp.ne.s32.totalorder %s23, %s24
    %p38 = scmp.eq.s32.totalorder %s16, 1
    %p39 = por %p37, %p38
    %p41 = scmp.ne.s32.totalorder %s24, %s40
    %p42 = scmp.eq.s32.totalorder %s16, 0
    %p43 = por %p41, %p42
    %s45 = sadd.s32 %s44, 1
    %p48 = scmp.eq.s32.totalorder %s10, 1
    %p49 = scmp.ne.s32.totalorder %s44, %s46
    %p50 = scmp.eq.s32.totalorder %s10, 0
    %p51 = por %p49, %p50
    %p52 = scmp.ne.s32.totalorder %s44, %s46
    %p53 = scmp.eq.s32.totalorder %s15, 1
    %p54 = por %p52, %p53
    %p55 = scmp.ne.s32.totalorder %s46, %s47
    %p56 = scmp.eq.s32.totalorder %s15, 0
    %p57 = por %p55, %p56
    %p58 = scmp.ne.s32.totalorder %s46, %s47
    %p59 = scmp.eq.s32.totalorder %s16, 1
    %p60 = por %p58, %p59
    %p62 = scmp.ne.s32.totalorder %s47, %s61
    %p63 = scmp.eq.s32.totalorder %s16, 0
    %p64 = por %p62, %p63
    %s66 = sadd.s32 %s65, 1
    %p69 = scmp.eq.s32.totalorder %s10, 1
    %p70 = scmp.ne.s32.totalorder %s65, %s67
    %p71 = scmp.eq.s32.totalorder %s10, 0
    %p72 = por %p70, %p71
    %p73 = scmp.ne.s32.totalorder %s65, %s67
    %p74 = scmp.eq.s32.totalorder %s15, 1
    %p75 = por %p73, %p74
    %p76 = scmp.ne.s32.totalorder %s67, %s68
    %p77 = scmp.eq.s32.totalorder %s15, 0
    %p78 = por %p76, %p77
    %p79 = scmp.ne.s32.totalorder %s67, %s68
    %p80 = scmp.eq.s32.totalorder %s16, 1
    %p81 = por %p79, %p80
    %p83 = scmp.ne.s32.totalorder %s68, %s82
    %p84 = scmp.eq.s32.totalorder %s16, 0
    %p85 = por %p83, %p84
    %s87 = sadd.s32 %s86, 1
    %p90 = scmp.eq.s32.totalorder %s10, 1
    %p91 = scmp.ne.s32.totalorder %s86, %s88
    %p92 = scmp.eq.s32.totalorder %s10, 0
    %p93 = por %p91, %p92
    %p94 = scmp.ne.s32.totalorder %s86, %s88
    %p95 = scmp.eq.s32.totalorder %s15, 1
    %p96 = por %p94, %p95
    %p97 = scmp.ne.s32.totalorder %s88, %s89
    %p98 = scmp.eq.s32.totalorder %s15, 0
    %p99 = por %p97, %p98
    %p100 = scmp.ne.s32.totalorder %s88, %s89
    %p101 = scmp.eq.s32.totalorder %s16, 1
    %p102 = por %p100, %p101
    %p104 = scmp.ne.s32.totalorder %s89, %s103
    %p105 = scmp.eq.s32.totalorder %s16, 0
    %p106 = por %p104, %p105
    %s107 = ssub.s32 %s10, %s17
    %p108 = scmp.eq.s32.totalorder %s107, 0
    %s110 = sadd.s32 %s109, 1
    %s111 = scalar_select %p108, %s109, %s110
    %p114 = pneg %p108
    %p115 = scmp.eq.s32.totalorder %s10, 1
    %p116 = por %p114, %p115
    %p117 = scmp.ne.s32.totalorder %s109, %s112
    %p118 = scmp.eq.s32.totalorder %s10, 0
    %p119 = por %p117, %p118
    %p120 = scmp.ne.s32.totalorder %s109, %s112
    %p121 = scmp.eq.s32.totalorder %s15, 1
    %p122 = por %p120, %p121
    %p123 = scmp.ne.s32.totalorder %s112, %s113
    %p124 = scmp.eq.s32.totalorder %s15, 0
    %p125 = por %p123, %p124
    %p126 = scmp.ne.s32.totalorder %s112, %s113
    %p127 = scmp.eq.s32.totalorder %s16, 1
    %p128 = por %p126, %p127
    %p130 = scmp.ne.s32.totalorder %s113, %s129
    %p131 = scmp.eq.s32.totalorder %s16, 0
    %p132 = por %p130, %p131
    %p133 = scmp.le.s32.totalorder 1, %s10
    %p134 = scmp.lt.s32.totalorder %s10, 3
    %p135 = pnand %p133, %p134
    %p136 = pneg %p135
    // Predicated region
    $region9: #{layer_norm_forward.1} parent=5 // pred_check
      _
    $region10: #{layer_norm_forward.1} parent=5 // pred_check_branch
      %138 = sbr.rel (%p135) target = $region12
    $region11: #{layer_norm_forward.1} parent=5 // pred_region
      %s139 = ssub.s32 %s10, 1
      // Predicated region
      $region13: #{layer_norm_forward.1} parent=11 // pred_check
        %p140 = pneg %p57
      $region14: #{layer_norm_forward.1} parent=11 // pred_check_branch
        %142 = sbr.rel (%p140) target = $region16
      $region15: #{layer_norm_forward.1} parent=11 // pred_region
        _
      $region16: #{layer_norm_forward.1} parent=11 // pred_fallthru
        _
      // Predicated region
      $region17: #{layer_norm_forward.1} parent=11 // pred_check
        %p143 = pneg %p78
      $region18: #{layer_norm_forward.1} parent=11 // pred_check_branch
        %145 = sbr.rel (%p143) target = $region20
      $region19: #{layer_norm_forward.1} parent=11 // pred_region
        _
      $region20: #{layer_norm_forward.1} parent=11 // pred_fallthru
        _
      // Predicated region
      $region21: #{layer_norm_forward.1} parent=11 // pred_check
        %p146 = pneg %p99
      $region22: #{layer_norm_forward.1} parent=11 // pred_check_branch
        %148 = sbr.rel (%p146) target = $region24
      $region23: #{layer_norm_forward.1} parent=11 // pred_region
        _
      $region24: #{layer_norm_forward.1} parent=11 // pred_fallthru
        _
    $region12: #{layer_norm_forward.1} parent=5 // pred_fallthru
      _
    %p149 = scmp.lt.s32.totalorder %s10, 2
    // Predicated region
    $region25: #{layer_norm_forward.1} parent=5 // pred_check
      %p150 = pneg %p149
    $region26: #{layer_norm_forward.1} parent=5 // pred_check_branch
      %152 = sbr.rel (%p150) target = $region28
    $region27: #{layer_norm_forward.1} parent=5 // pred_region
      // Predicated region
      $region29: #{layer_norm_forward.1} parent=27 // pred_check
        %p153 = pneg %p30
      $region30: #{layer_norm_forward.1} parent=27 // pred_check_branch
        %155 = sbr.rel (%p153) target = $region32
      $region31: #{layer_norm_forward.1} parent=27 // pred_region
        %s156 = smul.u32 2, %s10
        %p157 = scmp.lt.s32.totalorder %s156, 3
        %s158 = scalar_select %p157, %s156, 3
        %s159 = smul.addr %s158, 8
        %s160 = scalar_lea.vmem %s0, %s159
        %s161 = smul.u32 2, %s10
      $region32: #{layer_norm_forward.1} parent=27 // pred_fallthru
        _
    $region28: #{layer_norm_forward.1} parent=5 // pred_fallthru
      _
    %p162 = scmp.le.s32.totalorder 1, %s10
    %p163 = scmp.lt.s32.totalorder %s10, 3
    %p164 = pnand %p162, %p163
    %p165 = pneg %p164
    // Predicated region
    $region33: #{layer_norm_forward.1} parent=5 // pred_check
      _
    $region34: #{layer_norm_forward.1} parent=5 // pred_check_branch
      %167 = sbr.rel (%p164) target = $region36
    $region35: #{layer_norm_forward.1} parent=5 // pred_region
      %s168 = ssub.s32 %s10, 1
      %s169 = smul.u32 2, %s15
      %p170 = scmp.lt.s32.totalorder %s169, 3
      %s171 = scalar_select %p170, %s169, 3
      %s172 = smul.addr %s171, 8
      %s173 = scalar_lea.vmem %s0, %s172
      %p174 = pneg %p36
      %p175 = pneg %p33
      %p176 = pneg %p57
      %p177 = pneg %p54
      %p178 = pneg %p78
      %p179 = pneg %p75
      %p180 = pneg %p99
      %p181 = pneg %p96
      %p182 = pneg %p125
      %p183 = pneg %p122
      %s184 = smul.u32 2, %s15
      %p185 = scmp.lt.s32.totalorder %s184, 3
      %s186 = scalar_select %p185, %s184, 3
      %s187 = smul.addr %s186, 8
      %s188 = scalar_lea.vmem %s4, %s187
      %s189 = smul.u32 2, %s15
      %p190 = scmp.lt.s32.totalorder %s189, 3
      %s191 = scalar_select %p190, %s189, 3
      %s192 = smul.addr %s191, 8
      %s193 = scalar_lea.vmem %s0, %s192
      %s194 = smul.u32 2, %s15
      %s195 = smul.u32 2, %s15
      %p196 = scmp.lt.s32.totalorder %s195, 3
      %s197 = scalar_select %p196, %s195, 3
      %s198 = smul.addr %s197, 8
      %s199 = scalar_lea.vmem %s4, %s198
      %s200 = smul.u32 2, %s15
      %v202 = vld [vmem:[%s193] sm:$0xff]
      %v203 = vld [vmem:[%s193 + $0x8] sm:$0xff]
      %v204 = vld [vmem:[%s3] sm:$0xf]
      %v205 = vld [vmem:[%s3 + $0x4] sm:$0xf]
      %v206 = vld [vmem:[%s3 + $0x8] sm:$0xf]
      %v207 = vld [vmem:[%s3 + $0xc] sm:$0xf]
      %v208 = vld [vmem:[%s3 + $0x10] sm:$0xf]
      %v209 = vld [vmem:[%s3 + $0x14] sm:$0xf]
      %v210 = vld [vmem:[%s3 + $0x18] sm:$0xf]
      %v211 = vld [vmem:[%s3 + $0x1c] sm:$0xf]
      %v212 = vld [vmem:[%s3 + $0x20] sm:$0xf]
      %v213 = vld [vmem:[%s3 + $0x24] sm:$0xf]
      %v214 = vld [vmem:[%s3 + $0x28] sm:$0xf]
      %v215 = vld [vmem:[%s3 + $0x2c] sm:$0xf]
      %v216 = vld [vmem:[%s3 + $0x30] sm:$0xf]
      %v217 = vld [vmem:[%s3 + $0x34] sm:$0xf]
      %v218 = vld [vmem:[%s3 + $0x38] sm:$0xf]
      %v219 = vld [vmem:[%s3 + $0x3c] sm:$0xf]
      %v220 = vpack.c.bf16 %v203, %v202
      %v237 = vunpack.c.l.b16 %v204
      %v238 = vunpack.c.l.b16 %v205
      %v239 = vunpack.c.l.b16 %v206
      %v240 = vunpack.c.l.b16 %v207
      %v241 = vunpack.c.l.b16 %v208
      %v242 = vunpack.c.l.b16 %v209
      %v243 = vunpack.c.l.b16 %v210
      %v244 = vunpack.c.l.b16 %v211
      %v245 = vunpack.c.l.b16 %v212
      %v246 = vunpack.c.l.b16 %v213
      %v247 = vunpack.c.l.b16 %v214
      %v248 = vunpack.c.l.b16 %v215
      %v249 = vunpack.c.l.b16 %v216
      %v250 = vunpack.c.l.b16 %v217
      %v251 = vunpack.c.l.b16 %v218
      %v252 = vunpack.c.l.b16 %v219
      %v253 = vpack.c.b16 %v238, %v237
      %v254 = vpack.c.b16 %v240, %v239
      %v255 = vpack.c.b16 %v242, %v241
      %v256 = vpack.c.b16 %v244, %v243
      %v257 = vpack.c.b16 %v246, %v245
      %v258 = vpack.c.b16 %v248, %v247
      %v259 = vpack.c.b16 %v250, %v249
      %v260 = vpack.c.b16 %v252, %v251
      %269 = vmatprep.subr.bf16.mxu0 0
      %270 = vmatpush1.bf16.msra.mxu0 %v253
      %271 = vmatprep.subr.bf16.mxu0 0
      %272 = vmatpush1.bf16.msra.mxu0 %v254
      %273 = vmatprep.subr.bf16.mxu0 0
      %274 = vmatpush1.bf16.msra.mxu0 %v255
      %275 = vmatprep.subr.bf16.mxu0 0
      %276 = vmatpush1.bf16.msra.mxu0 %v256
      %277 = vmatprep.subr.bf16.mxu0 0
      %278 = vmatpush1.bf16.msra.mxu0 %v257
      %279 = vmatprep.subr.bf16.mxu0 0
      %280 = vmatpush1.bf16.msra.mxu0 %v258
      %281 = vmatprep.subr.bf16.mxu0 0
      %282 = vmatpush1.bf16.msra.mxu0 %v259
      %283 = vmatprep.subr.bf16.mxu0 0
      %284 = vmatpush1.bf16.msra.mxu0 %v260
      %285 = vmatprep.subr.bf16.mxu0 0
      %286 = vmatpush1.bf16.msra.mxu0 0
      %287 = vmatprep.subr.bf16.mxu0 0
      %288 = vmatpush1.bf16.msra.mxu0 0
      %289 = vmatprep.subr.bf16.mxu0 0
      %290 = vmatpush1.bf16.msra.mxu0 0
      %291 = vmatprep.subr.bf16.mxu0 0
      %292 = vmatpush1.bf16.msra.mxu0 0
      %293 = vmatprep.subr.bf16.mxu0 0
      %294 = vmatpush1.bf16.msra.mxu0 0
      %295 = vmatprep.subr.bf16.mxu0 0
      %296 = vmatpush1.bf16.msra.mxu0 0
      %297 = vmatprep.subr.bf16.mxu0 0
      %298 = vmatpush1.bf16.msra.mxu0 0
      %299 = vmatprep.subr.bf16.mxu0 0
      %300 = vmatpush1.bf16.msra.mxu0 0
      %301 = vmatprep.mubr.bf16.mxu0 0
      %302 = vmatmul.mubr.bf16.gmra.mrb[0].mxu0 %v220
      %v303 = vpop.f32.mrb[0].mxu0
      %v304 = vadd.f32 0.0, %v303
      %v305 = vpop.f32.mrb[0].mxu0
      %v306 = vpop.f32.mrb[0].mxu0
      %v307 = vadd.f32 0.0, %v306
      %v308 = vpop.f32.mrb[0].mxu0
      %309 = vdwg.mxu0
      %v310 = vmul.f32 %v304, 0.03125
      %v311 = vmul.f32 %v307, 0.03125
      %v312 = vsub.f32 %v202, %v310
      %v313 = vsub.f32 %v203, %v311
      %v314 = vmul.f32 %v312, %v312
      %v315 = vmul.f32 %v313, %v313
      %v316 = vpack.c.bf16 %v315, %v314
      %317 = vmatprep.subr.bf16.mxu0 0
      %318 = vmatpush1.bf16.msra.mxu0 %v253
      %319 = vmatprep.subr.bf16.mxu0 0
      %320 = vmatpush1.bf16.msra.mxu0 %v254
      %321 = vmatprep.subr.bf16.mxu0 0
      %322 = vmatpush1.bf16.msra.mxu0 %v255
      %323 = vmatprep.subr.bf16.mxu0 0
      %324 = vmatpush1.bf16.msra.mxu0 %v256
      %325 = vmatprep.subr.bf16.mxu0 0
      %326 = vmatpush1.bf16.msra.mxu0 %v257
      %327 = vmatprep.subr.bf16.mxu0 0
      %328 = vmatpush1.bf16.msra.mxu0 %v258
      %329 = vmatprep.subr.bf16.mxu0 0
      %330 = vmatpush1.bf16.msra.mxu0 %v259
      %331 = vmatprep.subr.bf16.mxu0 0
      %332 = vmatpush1.bf16.msra.mxu0 %v260
      %333 = vmatprep.subr.bf16.mxu0 0
      %334 = vmatpush1.bf16.msra.mxu0 0
      %335 = vmatprep.subr.bf16.mxu0 0
      %336 = vmatpush1.bf16.msra.mxu0 0
      %337 = vmatprep.subr.bf16.mxu0 0
      %338 = vmatpush1.bf16.msra.mxu0 0
      %339 = vmatprep.subr.bf16.mxu0 0
      %340 = vmatpush1.bf16.msra.mxu0 0
      %341 = vmatprep.subr.bf16.mxu0 0
      %342 = vmatpush1.bf16.msra.mxu0 0
      %343 = vmatprep.subr.bf16.mxu0 0
      %344 = vmatpush1.bf16.msra.mxu0 0
      %345 = vmatprep.subr.bf16.mxu0 0
      %346 = vmatpush1.bf16.msra.mxu0 0
      %347 = vmatprep.subr.bf16.mxu0 0
      %348 = vmatpush1.bf16.msra.mxu0 0
      %349 = vmatprep.mubr.bf16.mxu0 0
      %350 = vmatmul.mubr.bf16.gmra.mrb[0].mxu0 %v316
      %v351 = vpop.f32.mrb[0].mxu0
      %v352 = vadd.f32 0.0, %v351
      %v353 = vpop.f32.mrb[0].mxu0
      %v354 = vpop.f32.mrb[0].mxu0
      %v355 = vadd.f32 0.0, %v354
      %v356 = vpop.f32.mrb[0].mxu0
      %357 = vdwg.mxu0
      %v358 = vmul.f32 %v352, 0.03125
      %v359 = vmul.f32 %v355, 0.03125
      %v360 = vadd.f32 %v358, 1e-05
      %v361 = vadd.f32 %v359, 1e-05
      %v362 = vrsqrt.pop %v360
      %v363 = vrsqrt.pop %v361
      %v364 = vmul.f32 %v312, %v362
      %v365 = vmul.f32 %v313, %v363
      %v366 = vld [vmem:[%s1] sm:$0x1]
      %v368 = vlaneseq
      %v369 = vshrl.u32 %v368, 7
      %v370 = vsub.s32 0, %v369
      %v371 = vrot.slane %v366, %v370
      %v373 = vmul.f32 %v364, %v371
      %v374 = vmul.f32 %v365, %v371
      %v375 = vld [vmem:[%s2] sm:$0x1]
      %v377 = vlaneseq
      %v378 = vshrl.u32 %v377, 7
      %v379 = vsub.s32 0, %v378
      %v380 = vrot.slane %v375, %v379
      %v382 = vadd.f32 %v373, %v380
      %v383 = vadd.f32 %v374, %v380
      %384 = vst [vmem:[%s199] sm:$0xff] %v382
      %385 = vst [vmem:[%s199 + $0x8] sm:$0xff] %v383
      %s386 = smul.u32 2, %s15
      %p387 = scmp.lt.s32.totalorder %s386, 3
      %s388 = scalar_select %p387, %s386, 3
      %s389 = smul.addr %s388, 8
      %s390 = scalar_lea.vmem %s4, %s389
      // Predicated region
      $region37: #{layer_norm_forward.1} parent=35 // pred_check
        %p391 = pneg %p122
      $region38: #{layer_norm_forward.1} parent=35 // pred_check_branch
        %393 = sbr.rel (%p391) target = $region40
      $region39: #{layer_norm_forward.1} parent=35 // pred_region
        %s394 = smul.u32 2, %s15
      $region40: #{layer_norm_forward.1} parent=35 // pred_fallthru
        _
    $region36: #{layer_norm_forward.1} parent=5 // pred_fallthru
      _
    %p395 = scmp.le.s32.totalorder 2, %s10
    // Predicated region
    $region41: #{layer_norm_forward.1} parent=5 // pred_check
      %p396 = pneg %p395
    $region42: #{layer_norm_forward.1} parent=5 // pred_check_branch
      %398 = sbr.rel (%p396) target = $region44
    $region43: #{layer_norm_forward.1} parent=5 // pred_region
      %s399 = ssub.s32 %s10, 2
      // Predicated region
      $region45: #{layer_norm_forward.1} parent=43 // pred_check
        %p400 = pneg %p128
      $region46: #{layer_norm_forward.1} parent=43 // pred_check_branch
        %402 = sbr.rel (%p400) target = $region48
      $region47: #{layer_norm_forward.1} parent=43 // pred_region
        %s403 = smul.u32 2, %s16
        %p404 = scmp.lt.s32.totalorder %s403, 3
        %s405 = scalar_select %p404, %s403, 3
        %s406 = smul.addr %s405, 8
        %s407 = scalar_lea.vmem %s4, %s406
      $region48: #{layer_norm_forward.1} parent=43 // pred_fallthru
        _
    $region44: #{layer_norm_forward.1} parent=5 // pred_fallthru
      _
  $region6: #{layer_norm_forward.1} parent=0 // loop_footer
    %s14 = sadd.s32 1, %s10
  $region7: #{layer_norm_forward.1} parent=0 // loop_footer_branch
    %9 = sbr.rel target = $region3
  $region8: #{layer_norm_forward.1} parent=0 // loop_exit
    _

</llo_original>
